<compile_context>
chip_gen: v7x
topology: tpu7x:2x2x1
jax: 0.10.0
libtpu: 0.0.40
codegen_flags: <defaults>
</compile_context>

<pallas_src>
import jax
import jax.numpy as jnp
from jax import lax
from jax.experimental import pallas as pl
from jax.experimental.pallas import tpu as pltpu

_SUBLANE = 8


def _round_up(v, m):
    return ((v + m - 1) // m) * m


# --------------------------------------------------------------------------
# Kernels
# --------------------------------------------------------------------------
def _gaussian_head_fused_kernel(x_ref, w_ref, b_ref, out_ref):
    """One lane-dense [tile_m, 2*c_out] slab: cols [:c_out]=mu, [c_out:]=softplus."""
    x = x_ref[...]                       # [tile_m, c_in]
    w = w_ref[...]                       # [c_in, 2*c_out]   (pre-transposed in wrapper)
    b = b_ref[...]                       # [1, 2*c_out]

    y = jnp.dot(x, w, preferred_element_type=jnp.float32) + b
    # Numerically stable softplus in f32 (v5e has no bf16 EUP path).  Applying
    # it to the whole slab and masking is free EUP filler and avoids in-kernel
    # lane slicing for a non-128-aligned c_out boundary.
    sp = jnp.maximum(y, 0.0) + jnp.log1p(jnp.exp(-jnp.abs(y)))
    col = lax.broadcasted_iota(jnp.int32, (1, y.shape[1]), 1)   # row-broadcast mask
    out = jnp.where(col < (y.shape[1] // 2), y, sp)
    out_ref[...] = out.astype(out_ref.dtype)


def _gaussian_head_split_kernel(x_ref, w_ref, b_ref, mu_ref, sigma_ref):
    """Two outputs; only used when c_out % 128 == 0 (lane-aligned split)."""
    x = x_ref[...]                       # [tile_m, c_in]
    w = w_ref[...]                       # [c_in, 2*c_out]
    b = b_ref[...]                       # [1, 2*c_out]

    y = jnp.dot(x, w, preferred_element_type=jnp.float32) + b
    c_out = y.shape[1] // 2
    mu = y[:, :c_out]
    ps = y[:, c_out:]
    sigma = jnp.maximum(ps, 0.0) + jnp.log1p(jnp.exp(-jnp.abs(ps)))
    mu_ref[...] = mu.astype(mu_ref.dtype)
    sigma_ref[...] = sigma.astype(sigma_ref.dtype)


# --------------------------------------------------------------------------
# Tiling policy
# --------------------------------------------------------------------------
def _vmem_capacity_bytes():
    try:
        info = pltpu.get_tpu_info()
        cap = getattr(info, "vmem_capacity_bytes", None)
        if cap:
            return int(cap)
    except Exception:
        pass
    return 64 << 20      # conservative fallback: v7x per-TensorCore VMEM


def _choose_tiling(B, c_in, c_out, itemsize, tile_m):
    weight_bytes = c_in * 2 * c_out * itemsize
    bias_bytes = _round_up(2 * c_out, 128) * itemsize
    # Large resident weight (constant index map -> never re-copied): single-buffer it.
    weight_buffers = 1 if weight_bytes > (2 << 20) else 2

    vmem_cap = _vmem_capacity_bytes()
    budget = int(vmem_cap * 0.6)                       # headroom for Mosaic scratch

    if tile_m is None:
        if B <= 512:
            tile_m = B                                 # single grid step, full-dim block
        else:
            # Move >= ~2 MiB of x per grid step to amortize the ~0.35 us step cost.
            target = max(512, (2 << 20) // max(itemsize * c_in, 1))
            target = _round_up(target, 256)            # full MXU height on all gens
            if B >= 1024:
                # v7x megacore: keep at least 2 steps on the parallel axis.
                target = min(target, _round_up(pl.cdiv(B, 2), 256))
            tile_m = min(target, B)
    else:
        tile_m = min(int(tile_m), B)

    # VMEM-budget guard: x & out double-buffered, weight single/double-buffered.
    per_row = 2 * itemsize * (_round_up(c_in, 128) + _round_up(2 * c_out, 128))
    avail = budget - weight_buffers * weight_bytes - 2 * bias_bytes
    if avail < per_row * _SUBLANE:
        # TODO(synk): for weights this large, tile c_in with an extra "arbitrary"
        # grid axis + f32 accumulator scratch instead of a single-pass matmul.
        raise ValueError("Gaussian_head weights too large for single-pass VMEM plan")
    tile_m = min(tile_m, avail // per_row)

    if tile_m < B:
        # Blocks that do not span the whole batch must be sublane-aligned (f32).
        tile_m = max(_SUBLANE, (tile_m // _SUBLANE) * _SUBLANE)

    usage = weight_buffers * weight_bytes + 2 * bias_bytes + tile_m * per_row
    vmem_limit = min(int(vmem_cap * 0.75), max(32 << 20, usage + (4 << 20)))
    return tile_m, weight_buffers, vmem_limit


# --------------------------------------------------------------------------
# Wrapper
# --------------------------------------------------------------------------
def gaussian_head(x, w_mu, b_mu, w_ps, b_ps, *, tile_m=None):
    """Pallas TPU implementation of Gaussian_head.forward.

    Args:
      x:    [B, c_in]
      w_mu: [c_out, c_in] (PyTorch nn.Linear layout), b_mu: [c_out]
      w_ps: [c_out, c_in],                            b_ps: [c_out]
    Returns:
      (mu, sigma), each [B, c_out]; sigma = softplus(presigma).
    """
    x = jnp.asarray(x)
    B, c_in = x.shape
    c_out = w_mu.shape[0]
    itemsize = x.dtype.itemsize

    # Fuse the two heads and pre-transpose ONCE in the wrapper (one-time, tiny).
    # For repeated calls, hoist this to parameter-init time / under jit.
    w_t = jnp.concatenate([jnp.asarray(w_mu), jnp.asarray(w_ps)], axis=0).T     # [c_in, 2*c_out]
    b_cat = jnp.concatenate([jnp.asarray(b_mu), jnp.asarray(b_ps)]).reshape(1, 2 * c_out)
    w_t = w_t.astype(x.dtype)
    b_cat = b_cat.astype(x.dtype)

    tile_m, weight_buffers, vmem_limit = _choose_tiling(B, c_in, c_out, itemsize, tile_m)
    grid = (pl.cdiv(B, tile_m),)        # no jnp.pad: ragged final block handled by Pallas

    w_kwargs = dict(pipeline_mode=pl.Buffered(1)) if weight_buffers == 1 else {}
    x_spec = pl.BlockSpec((tile_m, c_in), lambda i: (i, 0))
    w_spec = pl.BlockSpec((c_in, 2 * c_out), lambda i: (0, 0), **w_kwargs)
    b_spec = pl.BlockSpec((1, 2 * c_out), lambda i: (0, 0), **w_kwargs)
    compiler_params = pltpu.CompilerParams(
        dimension_semantics=("parallel",), vmem_limit_bytes=vmem_limit)

    if c_out % 128 == 0:
        # Lane-aligned split: write mu / sigma directly (no wrapper re-slice pass).
        mu, sigma = pl.pallas_call(
            _gaussian_head_split_kernel,
            out_shape=(jax.ShapeDtypeStruct((B, c_out), x.dtype),
                       jax.ShapeDtypeStruct((B, c_out), x.dtype)),
            grid=grid,
            in_specs=[x_spec, w_spec, b_spec],
            out_specs=(pl.BlockSpec((tile_m, c_out), lambda i: (i, 0)),
                       pl.BlockSpec((tile_m, c_out), lambda i: (i, 0))),
            compiler_params=compiler_params,
        )(x, w_t, b_cat)
        return mu, sigma

    # Fused [B, 2*c_out] slab; split with a cheap wrapper slice (boundary is not
    # 128-aligned, so an in-kernel split would force a cross-lane relayout).
    out = pl.pallas_call(
        _gaussian_head_fused_kernel,
        out_shape=jax.ShapeDtypeStruct((B, 2 * c_out), x.dtype),
        grid=grid,
        in_specs=[x_spec, w_spec, b_spec],
        out_specs=pl.BlockSpec((tile_m, 2 * c_out), lambda i: (i, 0)),
        compiler_params=compiler_params,
    )(x, w_t, b_cat)
    return out[:, :c_out], out[:, c_out:]


# --------------------------------------------------------------------------
# Reference + self-test
# --------------------------------------------------------------------------
def _softplus(v):
    return jnp.maximum(v, 0.0) + jnp.log1p(jnp.exp(-jnp.abs(v)))


def _reference(x, w_mu, b_mu, w_ps, b_ps):
    mu = x @ w_mu.T + b_mu
    sigma = _softplus(x @ w_ps.T + b_ps)
    return mu, sigma


def _make_params(key, c_in, c_out):
    kwm, kbm, kwp, kbp = jax.random.split(key, 4)
    bound = 1.0 / (c_in ** 0.5)
    u = lambda k, s: jax.random.uniform(k, s, minval=-bound, maxval=bound, dtype=jnp.float32)
    return u(kwm, (c_out, c_in)), u(kbm, (c_out,)), u(kwp, (c_out, c_in)), u(kbp, (c_out,))


if __name__ == "__main__":
    key = jax.random.PRNGKey(0)
    k1, k2, k3, kp1, kp2 = jax.random.split(key, 5)

    # Case 1: fused-slab path (c_out not lane-aligned), divisible batch.
    B, c_in, c_out = 32, 32, 16
    w_mu, b_mu, w_ps, b_ps = _make_params(kp1, c_in, c_out)
    x = jax.random.normal(k1, (B, c_in), dtype=jnp.float32)
    mu, sigma = gaussian_head(x, w_mu, b_mu, w_ps, b_ps)
    jax.block_until_ready((mu, sigma))
    mu_r, sigma_r = _reference(x, w_mu, b_mu, w_ps, b_ps)
    assert mu.shape == (B, c_out) and sigma.shape == (B, c_out)
    assert jnp.allclose(mu, mu_r, atol=1e-5, rtol=1e-5)
    assert jnp.allclose(sigma, sigma_r, atol=1e-5, rtol=1e-5)
    assert bool(jnp.all(sigma > 0.0))

    # Case 2: non-8-multiple batch (full-dim block, no jnp.pad needed).
    B2 = 19
    x2 = jax.random.normal(k2, (B2, c_in), dtype=jnp.float32)
    mu2, sigma2 = gaussian_head(x2, w_mu, b_mu, w_ps, b_ps)
    jax.block_until_ready((mu2, sigma2))
    mu2_r, sigma2_r = _reference(x2, w_mu, b_mu, w_ps, b_ps)
    assert mu2.shape == (B2, c_out) and sigma2.shape == (B2, c_out)
    assert jnp.allclose(mu2, mu2_r, atol=1e-5, rtol=1e-5)
    assert jnp.allclose(sigma2, sigma2_r, atol=1e-5, rtol=1e-5)

    # Case 3: lane-aligned c_out -> two-output split kernel (no wrapper re-slice).
    B3, c_in3, c_out3 = 64, 48, 128
    w_mu3, b_mu3, w_ps3, b_ps3 = _make_params(kp2, c_in3, c_out3)
    x3 = jax.random.normal(k3, (B3, c_in3), dtype=jnp.float32)
    mu3, sigma3 = gaussian_head(x3, w_mu3, b_mu3, w_ps3, b_ps3)
    jax.block_until_ready((mu3, sigma3))
    mu3_r, sigma3_r = _reference(x3, w_mu3, b_mu3, w_ps3, b_ps3)
    assert mu3.shape == (B3, c_out3) and sigma3.shape == (B3, c_out3)
    assert jnp.allclose(mu3, mu3_r, atol=1e-5, rtol=1e-5)
    assert jnp.allclose(sigma3, sigma3_r, atol=1e-5, rtol=1e-5)
    assert bool(jnp.all(sigma3 > 0.0))

    print("KERNEL_OK")
</pallas_src>

<mosaic_0001>
module attributes {stable_mosaic.version = 11 : i64} {
  func.func @_gaussian_head_fused_kernel(%arg0: i32, %arg1: memref<32x32xf32, #tpu.memory_space<vmem>>, %arg2: memref<32x32xf32, #tpu.memory_space<vmem>>, %arg3: memref<1x32xf32, #tpu.memory_space<vmem>>, %arg4: memref<32x32xf32, #tpu.memory_space<vmem>>) attributes {dimension_semantics = [#tpu.dimension_semantics<parallel>], iteration_bounds = array<i64: 1>, scalar_prefetch = 0 : i64, scratch_operands = 0 : i64, tpu.core_type = #tpu.core_type<tc>, window_params = [{transform_indices = @transform_0, window_bounds = array<i64: 32, 32>}, {pipeline_mode = #tpu.pipeline_mode<synchronous>, transform_indices = @transform_1, window_bounds = array<i64: 32, 32>}, {pipeline_mode = #tpu.pipeline_mode<synchronous>, transform_indices = @transform_2, window_bounds = array<i64: 1, 32>}, {transform_indices = @transform_3, window_bounds = array<i64: 32, 32>}]} {
    %c0 = arith.constant 0 : index
    %c0_0 = arith.constant 0 : index
    %0 = vector.load %arg1[%c0, %c0_0] : memref<32x32xf32, #tpu.memory_space<vmem>>, vector<32x32xf32>
    %c0_1 = arith.constant 0 : index
    %c0_2 = arith.constant 0 : index
    %1 = vector.load %arg2[%c0_1, %c0_2] : memref<32x32xf32, #tpu.memory_space<vmem>>, vector<32x32xf32>
    %c0_3 = arith.constant 0 : index
    %c0_4 = arith.constant 0 : index
    %2 = vector.load %arg3[%c0_3, %c0_4] : memref<1x32xf32, #tpu.memory_space<vmem>>, vector<1x32xf32>
    %cst = arith.constant dense<0.000000e+00> : vector<32x32xf32>
    %3 = tpu.matmul %0, %1, %cst {dimension_numbers = #tpu.dot_dimension_numbers<[1], [0], [0], [1], [0, 0, 1, 1], [], []>} : vector<32x32xf32>, vector<32x32xf32>, vector<32x32xf32> -> vector<32x32xf32>
    %4 = vector.broadcast %2 : vector<1x32xf32> to vector<32x32xf32>
    %5 = arith.addf %3, %4 : vector<32x32xf32>
    %cst_5 = arith.constant 0.000000e+00 : f32
    %6 = vector.broadcast %cst_5 : f32 to vector<32x32xf32>
    %7 = arith.maximumf %5, %6 : vector<32x32xf32>
    %8 = math.absf %5 : vector<32x32xf32>
    %cst_6 = arith.constant 0.000000e+00 : f32
    %9 = vector.broadcast %cst_6 : f32 to vector<32x32xf32>
    %10 = arith.subf %9, %8 : vector<32x32xf32>
    %11 = math.exp %10 : vector<32x32xf32>
    %12 = math.log1p %11 : vector<32x32xf32>
    %13 = arith.addf %7, %12 : vector<32x32xf32>
    %14 = tpu.iota {dimensions = array<i32: 1>} : vector<1x32xi32>
    %c16_i32 = arith.constant 16 : i32
    %15 = vector.broadcast %c16_i32 : i32 to vector<1x32xi32>
    %16 = arith.cmpi slt, %14, %15 : vector<1x32xi32>
    %17 = vector.shape_cast %16 : vector<1x32xi1> to vector<1x32xi1>
    %18 = vector.broadcast %17 : vector<1x32xi1> to vector<32x32xi1>
    %19 = arith.select %18, %5, %13 : vector<32x32xi1>, vector<32x32xf32>
    %c0_7 = arith.constant 0 : index
    %c0_8 = arith.constant 0 : index
    %20 = vector.load %arg4[%c0_7, %c0_8] : memref<32x32xf32, #tpu.memory_space<vmem>>, vector<32x32xf32>
    tpu.vector_store %arg4[%c0_7, %c0_8], %19 {strides = array<i32>} : memref<32x32xf32, #tpu.memory_space<vmem>>, vector<32x32xf32>,
    return
  }
  func.func @transform_0(%arg0: i32) -> (i32, i32) {
    %c0_i32 = arith.constant 0 : i32
    %c0_i32_0 = arith.constant 0 : i32
    return %arg0, %c0_i32 : i32, i32
  }
  func.func @transform_1(%arg0: i32) -> (i32, i32) {
    %c0_i32 = arith.constant 0 : i32
    %c0_i32_0 = arith.constant 0 : i32
    %c0_i32_1 = arith.constant 0 : i32
    return %c0_i32, %c0_i32_0 : i32, i32
  }
  func.func @transform_2(%arg0: i32) -> (i32, i32) {
    %c0_i32 = arith.constant 0 : i32
    %c0_i32_0 = arith.constant 0 : i32
    %c0_i32_1 = arith.constant 0 : i32
    return %c0_i32, %c0_i32_0 : i32, i32
  }
  func.func @transform_3(%arg0: i32) -> (i32, i32) {
    %c0_i32 = arith.constant 0 : i32
    %c0_i32_0 = arith.constant 0 : i32
    return %arg0, %c0_i32 : i32, i32
  }
}

</mosaic_0001>

<llo_original>
// kernel: tpu_custom_call.1
$region0: #{tpu_custom_call.1}
  #allocation0 [shape = 'u32[]', space=smem, size = 0x4, offset = 0x4, fixed_abs, tag = 'smem constant byte address 0x4 - core index']
  #allocation1 [shape = 'u32[144,128]{1,0:T(1,128)}', space=vmem, size = 0x12000, scoped, tag = 'internal scratch']
  %s0 = inlined_call_operand.hbm [shape: f32[32,32], index: 0, kind: input, shape index: {}]
  %s1 = inlined_call_operand.hbm [shape: f32[32,32], index: 1, kind: input, shape index: {}]
  %s2 = inlined_call_operand.vmem [shape: f32[1,32], index: 2, kind: input, shape index: {}]
  %s3 = inlined_call_operand.hbm [shape: f32[32,32], index: 3, kind: output, shape index: {}]
  %s4 = sld [smem:[#allocation0]]
  $region30: #{tpu_custom_call.1} parent=0
    _
  %s6 = ssub.s32 1, %s4
  %s7 = scalar_select 0, %s6, %s4
  $region1: #{tpu_custom_call.1} parent=0
    #allocation2 [shape = 'u8[16384]{0}', space=vmem, size = 0x4000, scoped, tag = 'input window, operand 0, single buffered']
    #allocation3 [shape = 's32[1]{0}', space=sflag, size = 0x4, scoped, tag = 'scoped memory for tpu_custom_call.1']
    #allocation4 [shape = 's32[1]{0}', space=sflag, size = 0x4, scoped, tag = 'scoped memory for tpu_custom_call.1']
    #allocation5 [shape = 'u8[16384]{0}', space=vmem, size = 0x4000, scoped, tag = 'input window, operand 1, single buffered']
    #allocation6 [shape = 's32[1]{0}', space=sflag, size = 0x4, scoped, tag = 'scoped memory for tpu_custom_call.1']
    #allocation7 [shape = 'u8[16384]{0}', space=vmem, size = 0x4000, scoped, tag = 'output window, operand 0, single buffered']
    %8 = vsyncpa [#allocation3], 0
    %9 = vsyncpa [#allocation6], 0
    %10 = vsyncpa [#allocation4], 0
    // Predicated region
    $region2: #{tpu_custom_call.1} parent=1 // pred_check
      _
    $region3: #{tpu_custom_call.1} parent=1 // pred_check_branch
      %12 = sbr.rel (0) target = $region5
    $region4: #{tpu_custom_call.1} parent=1 // pred_region
      %s14 = ssub.s32 512, 512
      %15 = vsyncadd [#allocation3], %s14
      %s16 = sshll.u32 [#allocation2], 4
      %s17 = int_to_ptr.vmem [resolvable:$true] %s16
      %22 = dma.hbm_to_vmem [thread:$0]  %s0, 512, %s17, [#allocation3], 128, 128, 8
    $region5: #{tpu_custom_call.1} parent=1 // pred_fallthru
      _
    // Predicated region
    $region6: #{tpu_custom_call.1} parent=1 // pred_check
      _
    $region7: #{tpu_custom_call.1} parent=1 // pred_check_branch
      %24 = sbr.rel (0) target = $region9
    $region8: #{tpu_custom_call.1} parent=1 // pred_region
      %s26 = ssub.s32 512, 512
      %27 = vsyncadd [#allocation6], %s26
      %s28 = sshll.u32 [#allocation5], 4
      %s29 = int_to_ptr.vmem [resolvable:$true] %s28
      %34 = dma.hbm_to_vmem [thread:$0]  %s1, 512, %s29, [#allocation6], 128, 128, 8
    $region9: #{tpu_custom_call.1} parent=1 // pred_fallthru
      _
    // Predicated region
    $region10: #{tpu_custom_call.1} parent=1 // pred_check
      _
    $region11: #{tpu_custom_call.1} parent=1 // pred_check_branch
      %36 = sbr.rel (0) target = $region13
    $region12: #{tpu_custom_call.1} parent=1 // pred_region
      _
    $region13: #{tpu_custom_call.1} parent=1 // pred_fallthru
      _
    // Predicated region
    $region14: #{tpu_custom_call.1} parent=1 // pred_check
      _
    $region15: #{tpu_custom_call.1} parent=1 // pred_check_branch
      %38 = sbr.rel (0) target = $region17
    $region16: #{tpu_custom_call.1} parent=1 // pred_region
      %39 = dma.done [#allocation3], 512
    $region17: #{tpu_custom_call.1} parent=1 // pred_fallthru
      _
    // Predicated region
    $region18: #{tpu_custom_call.1} parent=1 // pred_check
      _
    $region19: #{tpu_custom_call.1} parent=1 // pred_check_branch
      %41 = sbr.rel (0) target = $region21
    $region20: #{tpu_custom_call.1} parent=1 // pred_region
      %42 = dma.done [#allocation6], 512
    $region21: #{tpu_custom_call.1} parent=1 // pred_fallthru
      _
    %v43 = vld [vmem:[#allocation2] sm:$0xff]
    %v44 = vld [vmem:[#allocation2 + $0x8] sm:$0xff]
    %v45 = vld [vmem:[#allocation2 + $0x10] sm:$0xff]
    %v46 = vld [vmem:[#allocation2 + $0x18] sm:$0xff]
    %v47 = vld [vmem:[#allocation5] sm:$0xff]
    %v48 = vld [vmem:[#allocation5 + $0x8] sm:$0xff]
    %v49 = vld [vmem:[#allocation5 + $0x10] sm:$0xff]
    %v50 = vld [vmem:[#allocation5 + $0x18] sm:$0xff]
    %v51 = vld [vmem:[%s2] sm:$0x1]
    %v53 = vlaneseq
    %v54 = vshrl.u32 %v53, 7
    %v55 = vsub.s32 0, %v54
    %v56 = vrot.slane %v51, %v55
    %vm58 = vcmask 261120
    %v60 = vsel %vm58, %v43, 0
    %v63 = vsel %vm58, %v44, 0
    %v66 = vsel %vm58, %v45, 0
    %v69 = vsel %vm58, %v46, 0
    %71 = vmatprep.subr.mxu0 0.0
    %72 = vmatpush1.msra.mxu0 %v47
    %73 = vmatprep.subr.mxu0 0.0
    %74 = vmatpush1.msra.mxu0 %v48
    %75 = vmatprep.subr.mxu0 0.0
    %76 = vmatpush1.msra.mxu0 %v49
    %77 = vmatprep.subr.mxu0 0.0
    %78 = vmatpush1.msra.mxu0 %v50
    %79 = vmatprep.subr.mxu0 0.0
    %80 = vmatpush1.msra.mxu0 0.0
    %81 = vmatprep.subr.mxu0 0.0
    %82 = vmatpush1.msra.mxu0 0.0
    %83 = vmatprep.subr.mxu0 0.0
    %84 = vmatpush1.msra.mxu0 0.0
    %85 = vmatprep.subr.mxu0 0.0
    %86 = vmatpush1.msra.mxu0 0.0
    %87 = vmatprep.subr.mxu0 0.0
    %88 = vmatpush1.msra.mxu0 0.0
    %89 = vmatprep.subr.mxu0 0.0
    %90 = vmatpush1.msra.mxu0 0.0
    %91 = vmatprep.subr.mxu0 0.0
    %92 = vmatpush1.msra.mxu0 0.0
    %93 = vmatprep.subr.mxu0 0.0
    %94 = vmatpush1.msra.mxu0 0.0
    %95 = vmatprep.subr.mxu0 0.0
    %96 = vmatpush1.msra.mxu0 0.0
    %97 = vmatprep.subr.mxu0 0.0
    %98 = vmatpush1.msra.mxu0 0.0
    %99 = vmatprep.subr.mxu0 0.0
    %100 = vmatpush1.msra.mxu0 0.0
    %101 = vmatprep.subr.mxu0 0.0
    %102 = vmatpush1.msra.mxu0 0.0
    %103 = vmatprep.subr.mxu0 0.0
    %104 = vmatpush1.msra.mxu0 0.0
    %105 = vmatprep.subr.mxu0 0.0
    %106 = vmatpush1.msra.mxu0 0.0
    %107 = vmatprep.subr.mxu0 0.0
    %108 = vmatpush1.msra.mxu0 0.0
    %109 = vmatprep.subr.mxu0 0.0
    %110 = vmatpush1.msra.mxu0 0.0
    %111 = vmatprep.subr.mxu0 0.0
    %112 = vmatpush1.msra.mxu0 0.0
    %113 = vmatprep.subr.mxu0 0.0
    %114 = vmatpush1.msra.mxu0 0.0
    %115 = vmatprep.subr.mxu0 0.0
    %116 = vmatpush1.msra.mxu0 0.0
    %117 = vmatprep.subr.mxu0 0.0
    %118 = vmatpush1.msra.mxu0 0.0
    %119 = vmatprep.subr.mxu0 0.0
    %120 = vmatpush1.msra.mxu0 0.0
    %121 = vmatprep.subr.mxu0 0.0
    %122 = vmatpush1.msra.mxu0 0.0
    %123 = vmatprep.subr.mxu0 0.0
    %124 = vmatpush1.msra.mxu0 0.0
    %125 = vmatprep.subr.mxu0 0.0
    %126 = vmatpush1.msra.mxu0 0.0
    %127 = vmatprep.subr.mxu0 0.0
    %128 = vmatpush1.msra.mxu0 0.0
    %129 = vmatprep.subr.mxu0 0.0
    %130 = vmatpush1.msra.mxu0 0.0
    %131 = vmatprep.subr.mxu0 0.0
    %132 = vmatpush1.msra.mxu0 0.0
    %133 = vmatprep.subr.mxu0 0.0
    %134 = vmatpush1.msra.mxu0 0.0
    %135 = vmatprep.mubr.f32.mxu0 0.0
    %136 = vmatmul.mubr.f32.gmra.mrb[0].mxu0 %v60
    %v137 = vpop.f32.mrb[0].mxu0
    %v138 = vadd.f32 %v56, %v137
    %v139 = vpop.f32.mrb[0].mxu0
    %140 = vmatprep.mubr.f32.mxu0 0.0
    %141 = vmatmul.mubr.f32.gmra.mrb[0].mxu0 %v63
    %v142 = vpop.f32.mrb[0].mxu0
    %v143 = vadd.f32 %v56, %v142
    %v144 = vpop.f32.mrb[0].mxu0
    %145 = vmatprep.mubr.f32.mxu0 0.0
    %146 = vmatmul.mubr.f32.gmra.mrb[0].mxu0 %v66
    %v147 = vpop.f32.mrb[0].mxu0
    %v148 = vadd.f32 %v56, %v147
    %v149 = vpop.f32.mrb[0].mxu0
    %150 = vmatprep.mubr.f32.mxu0 0.0
    %151 = vmatmul.mubr.f32.gmra.mrb[0].mxu0 %v69
    %v152 = vpop.f32.mrb[0].mxu0
    %v153 = vadd.f32 %v56, %v152
    %v154 = vpop.f32.mrb[0].mxu0
    %155 = vdwg.mxu0
    %v156 = vmax.f32 %v138, 0.0
    %v157 = vmax.f32 %v143, 0.0
    %v158 = vmax.f32 %v148, 0.0
    %v159 = vmax.f32 %v153, 0.0
    %v160 = vand.u32 2147483647, %v138
    %v161 = vand.u32 2147483647, %v143
    %v162 = vand.u32 2147483647, %v148
    %v163 = vand.u32 2147483647, %v153
    %v164 = vsub.f32 0.0, %v160
    %v165 = vsub.f32 0.0, %v161
    %v166 = vsub.f32 0.0, %v162
    %v167 = vsub.f32 0.0, %v163
    %v168 = vmul.f32 %v164, 1.442695
    %v169 = vpow.pop %v168
    %v170 = vmul.f32 %v165, 1.442695
    %v171 = vpow.pop %v170
    %v172 = vmul.f32 %v166, 1.442695
    %v173 = vpow.pop %v172
    %v174 = vmul.f32 %v167, 1.442695
    %v175 = vpow.pop %v174
    %v176 = vadd.f32 %v169, 1.0
    %v177 = vlog2.pop %v176
    %v178 = vmul.f32 %v177, 0.6931472
    %v179 = vmul.f32 -0.5, %v169
    %v180 = vadd.f32 %v179, 1.0
    %v181 = vmul.f32 %v180, %v169
    %v182 = vand.u32 2147483647, %v169
    %vm183 = vcmp.lt.f32.partialorder %v182, 0.0004427343
    %v184 = vsel %vm183, %v181, %v178
    %v185 = vadd.f32 %v171, 1.0
    %v186 = vlog2.pop %v185
    %v187 = vmul.f32 %v186, 0.6931472
    %v188 = vmul.f32 -0.5, %v171
    %v189 = vadd.f32 %v188, 1.0
    %v190 = vmul.f32 %v189, %v171
    %v191 = vand.u32 2147483647, %v171
    %vm192 = vcmp.lt.f32.partialorder %v191, 0.0004427343
    %v193 = vsel %vm192, %v190, %v187
    %v194 = vadd.f32 %v173, 1.0
    %v195 = vlog2.pop %v194
    %v196 = vmul.f32 %v195, 0.6931472
    %v197 = vmul.f32 -0.5, %v173
    %v198 = vadd.f32 %v197, 1.0
    %v199 = vmul.f32 %v198, %v173
    %v200 = vand.u32 2147483647, %v173
    %vm201 = vcmp.lt.f32.partialorder %v200, 0.0004427343
    %v202 = vsel %vm201, %v199, %v196
    %v203 = vadd.f32 %v175, 1.0
    %v204 = vlog2.pop %v203
    %v205 = vmul.f32 %v204, 0.6931472
    %v206 = vmul.f32 -0.5, %v175
    %v207 = vadd.f32 %v206, 1.0
    %v208 = vmul.f32 %v207, %v175
    %v209 = vand.u32 2147483647, %v175
    %vm210 = vcmp.lt.f32.partialorder %v209, 0.0004427343
    %v211 = vsel %vm210, %v208, %v205
    %v212 = vadd.f32 %v156, %v184
    %v213 = vadd.f32 %v157, %v193
    %v214 = vadd.f32 %v158, %v202
    %v215 = vadd.f32 %v159, %v211
    %v216 = vlaneseq
    %v217 = vand.u32 %v216, 127
    %vm218 = vcmp.lt.s32.totalorder %v217, 16
    %v219 = vsel %vm218, 1, 0
    %vm220 = vcmp.eq.s32.totalorder %v219, 1
    %v221 = vsel %vm220, %v138, %v212
    %v222 = vsel %vm220, %v143, %v213
    %v223 = vsel %vm220, %v148, %v214
    %v224 = vsel %vm220, %v153, %v215
    %225 = vst.msk [vmem:[#allocation7] sm:$0xff] %vm58, %v221
    %226 = vst.msk [vmem:[#allocation7 + $0x8] sm:$0xff] %vm58, %v222
    %227 = vst.msk [vmem:[#allocation7 + $0x10] sm:$0xff] %vm58, %v223
    %228 = vst.msk [vmem:[#allocation7 + $0x18] sm:$0xff] %vm58, %v224
    // Predicated region
    $region22: #{tpu_custom_call.1} parent=1 // pred_check
      _
    $region23: #{tpu_custom_call.1} parent=1 // pred_check_branch
      %230 = sbr.rel (0) target = $region25
    $region24: #{tpu_custom_call.1} parent=1 // pred_region
      %s232 = ssub.s32 512, 512
      %233 = vsyncadd [#allocation4], %s232
      %s234 = sshll.u32 [#allocation7], 4
      %s235 = int_to_ptr.vmem [resolvable:$true] %s234
      %240 = dma.vmem_to_hbm [thread:$0]  %s235, 512, %s3, [#allocation4], 128, 128, 8
    $region25: #{tpu_custom_call.1} parent=1 // pred_fallthru
      _
    // Predicated region
    $region26: #{tpu_custom_call.1} parent=1 // pred_check
      _
    $region27: #{tpu_custom_call.1} parent=1 // pred_check_branch
      %242 = sbr.rel (0) target = $region29
    $region28: #{tpu_custom_call.1} parent=1 // pred_region
      %243 = dma.done [#allocation4], 512
    $region29: #{tpu_custom_call.1} parent=1 // pred_fallthru
      _
    %244 = vsyncpa [#allocation3], 1
    %245 = vsyncpa [#allocation6], 1
    %246 = vsyncpa [#allocation4], 1

</llo_original>
